<compile_context>
chip_gen: v5e
topology: v5e:2x2
jax: 0.10.0
libtpu: 0.0.40
codegen_flags: <defaults>
</compile_context>

<pallas_src>
import functools
import math

import jax
import jax.numpy as jnp
from jax import lax
from jax.experimental import pallas as pl
from jax.experimental.pallas import tpu as pltpu

_LANE = 128
_MAX_BLOCK_ROWS = 2048          # (2048, 128) f32 block = 1 MiB
_USE_HW_PRNG = jax.default_backend() == "tpu"


def _round_up(x, m):
    return ((x + m - 1) // m) * m


def _hash_u32(x):
    """'lowbias32' integer finalizer (fallback path only): VPU-only ops."""
    x = x ^ (x >> 16)
    x = x * jnp.uint32(0x7FEB352D)
    x = x ^ (x >> 15)
    x = x * jnp.uint32(0x846CA68B)
    x = x ^ (x >> 16)
    return x


def _uniform01(bits_u32):
    """uint32 random bits -> f32 uniform in [0, 1) via exponent-bitcast trick."""
    fbits = (bits_u32 >> jnp.uint32(9)) | jnp.uint32(0x3F800000)   # float in [1, 2)
    return lax.bitcast_convert_type(fbits, jnp.float32) - jnp.float32(1.0)


def _sampling_kernel(seed_ref, x_ref, o_ref, *, use_hw_prng):
    r, c = x_ref.shape            # static block shape; r % 16 == 0, c == _LANE
    rh = r // 2

    if use_hw_prng:
        # Hardware PRNG: per-block stream keyed on (seed, program_id) so the
        # result is deterministic and core-assignment independent.
        pltpu.prng_seed(seed_ref[0], pl.program_id(0), jnp.int32(0x6A09E667))
        b1 = pltpu.bitcast(pltpu.prng_random_bits((rh, c)), jnp.uint32)
        b2 = pltpu.bitcast(pltpu.prng_random_bits((rh, c)), jnp.uint32)
    else:
        # Portable fallback: counter-based hash of the global flat element
        # index (uint32 math throughout, so no int32 wrap for huge inputs).
        seed_u = seed_ref[0].astype(jnp.uint32)
        row0 = pl.program_id(0) * r
        rows = (lax.broadcasted_iota(jnp.int32, (rh, c), 0) + row0).astype(jnp.uint32)
        cols = lax.broadcasted_iota(jnp.int32, (rh, c), 1).astype(jnp.uint32)
        idx2 = (rows * jnp.uint32(c) + cols) << jnp.uint32(1)
        b1 = _hash_u32(idx2 ^ seed_u)
        b2 = _hash_u32((idx2 | jnp.uint32(1)) ^ seed_u)

    # Box-Muller, both outputs used; one output fills the top half-block, the
    # other (cos(theta - pi/2) == sin(theta)) the bottom half.
    u1 = jnp.float32(1.0) - _uniform01(b1)            # (0, 1] -> log stays finite
    u2 = _uniform01(b2)
    rad = jnp.sqrt(jnp.float32(-2.0) * jnp.log(u1))
    theta = jnp.float32(2.0 * math.pi) * u2
    z_top = rad * jnp.cos(theta)
    z_bot = rad * jnp.cos(theta - jnp.float32(0.5 * math.pi))

    # f32 add, single cast to the output dtype; aligned half-block stores.
    o_ref[0:rh, :] = (x_ref[0:rh, :].astype(jnp.float32) + z_top).astype(o_ref.dtype)
    o_ref[rh:r, :] = (x_ref[rh:r, :].astype(jnp.float32) + z_bot).astype(o_ref.dtype)


@jax.jit
def _sampling_impl(inputs, seed):
    orig_shape = inputs.shape
    orig_dtype = inputs.dtype

    flat = inputs.reshape(-1)
    n = flat.shape[0]

    # Only pad to a lane multiple (<=127 extra elements) and only when needed;
    # typical NN tensor sizes hit the zero-copy path.
    n_pad = _round_up(n, _LANE)
    if n_pad != n:
        flat = jnp.pad(flat, (0, n_pad - n))
    rows = n_pad // _LANE
    x2d = flat.reshape(rows, _LANE)

    # Block sizing: at least 2 programs whenever possible (v7x megacore split),
    # blocks up to _MAX_BLOCK_ROWS rows, always a multiple of 16 rows so the
    # Box-Muller half-split stays tile-aligned.  Ragged last blocks are masked
    # by Pallas, so `rows` need not divide evenly.
    target_programs = max(2, pl.cdiv(rows, _MAX_BLOCK_ROWS))
    block_rows = _round_up(pl.cdiv(rows, target_programs), 16)
    block_rows = max(16, min(block_rows, _round_up(rows, 16)))
    grid = pl.cdiv(rows, block_rows)

    kernel = functools.partial(_sampling_kernel, use_hw_prng=_USE_HW_PRNG)
    out2d = pl.pallas_call(
        kernel,
        out_shape=jax.ShapeDtypeStruct((rows, _LANE), x2d.dtype),
        grid_spec=pltpu.PrefetchScalarGridSpec(
            num_scalar_prefetch=1,
            grid=(grid,),
            in_specs=[pl.BlockSpec((block_rows, _LANE), lambda i, s: (i, 0))],
            out_specs=pl.BlockSpec((block_rows, _LANE), lambda i, s: (i, 0)),
        ),
        compiler_params=pltpu.CompilerParams(
            # Independent blocks -> shard across both TensorCores on v7x.
            dimension_semantics=("parallel",),
            vmem_limit_bytes=32 * 1024 * 1024,
        ),
    )(seed.reshape((1,)), x2d)

    out = out2d.reshape(-1)
    if n_pad != n:
        out = out[:n]
    return out.reshape(orig_shape).astype(orig_dtype)


def sampling(inputs, seed=0):
    """inputs + N(0, 1) noise; noise generated inside the Pallas kernel."""
    return _sampling_impl(inputs, jnp.asarray(seed, dtype=jnp.int32))


if __name__ == "__main__":
    key = jax.random.PRNGKey(0)
    # Shape-agnostic module; use an NCHW-like small input.
    x = jax.random.normal(key, (2, 4, 16, 16), dtype=jnp.float32)

    out = sampling(x, seed=0)
    out = jax.block_until_ready(out)

    assert out.shape == x.shape and out.dtype == x.dtype

    # Sanity: out - x should be ~N(0, 1) noise (mean ~0, std ~1), not all zeros.
    noise = out - x
    m = float(jnp.mean(noise))
    s = float(jnp.std(noise))
    assert abs(m) < 0.2, f"noise mean too large: {m}"
    assert 0.7 < s < 1.3, f"noise std off: {s}"

    # Different runtime seed -> different noise, with no recompile.
    out2 = jax.block_until_ready(sampling(x, seed=1))
    assert not bool(jnp.allclose(out, out2)), "seed did not change the noise"

    print("KERNEL_OK")
</pallas_src>

<mosaic_0001>
module attributes {stable_mosaic.version = 11 : i64} {
  func.func @_sampling_kernel(%arg0: i32, %arg1: memref<1xi32, #tpu.memory_space<smem>>, %arg2: memref<16x128xf32, #tpu.memory_space<vmem>>, %arg3: memref<16x128xf32, #tpu.memory_space<vmem>>) attributes {dimension_semantics = [#tpu.dimension_semantics<parallel>], iteration_bounds = array<i64: 1>, scalar_prefetch = 1 : i64, scratch_operands = 0 : i64, tpu.core_type = #tpu.core_type<tc>, window_params = [{transform_indices = @transform_0, window_bounds = array<i64: 16, 128>}, {transform_indices = @transform_1, window_bounds = array<i64: 16, 128>}]} {
    %c0 = arith.constant 0 : index
    %0 = memref.load %arg1[%c0] : memref<1xi32, #tpu.memory_space<smem>>
    %c16_i32 = arith.constant 16 : i32
    %1 = arith.muli %arg0, %c16_i32 : i32
    %2 = tpu.iota {dimensions = array<i32: 0>} : vector<8x128xi32>
    %3 = vector.broadcast %1 : i32 to vector<8x128xi32>
    %4 = arith.addi %2, %3 : vector<8x128xi32>
    %5 = tpu.iota {dimensions = array<i32: 1>} : vector<8x128xi32>
    %c128_i32 = arith.constant 128 : i32
    %6 = vector.broadcast %c128_i32 : i32 to vector<8x128xi32>
    %7 = arith.muli %4, %6 : vector<8x128xi32>
    %8 = arith.addi %7, %5 : vector<8x128xi32>
    %c1_i32 = arith.constant 1 : i32
    %9 = vector.broadcast %c1_i32 : i32 to vector<8x128xi32>
    %10 = arith.shli %8, %9 : vector<8x128xi32>
    %11 = vector.broadcast %0 : i32 to vector<8x128xi32>
    %12 = arith.xori %10, %11 : vector<8x128xi32>
    %c16_i32_0 = arith.constant 16 : i32
    %13 = vector.broadcast %c16_i32_0 : i32 to vector<8x128xi32>
    %14 = arith.shrui %12, %13 : vector<8x128xi32>
    %15 = arith.xori %12, %14 : vector<8x128xi32>
    %c2146121005_i32 = arith.constant 2146121005 : i32
    %16 = vector.broadcast %c2146121005_i32 : i32 to vector<8x128xi32>
    %17 = arith.muli %15, %16 : vector<8x128xi32>
    %c15_i32 = arith.constant 15 : i32
    %18 = vector.broadcast %c15_i32 : i32 to vector<8x128xi32>
    %19 = arith.shrui %17, %18 : vector<8x128xi32>
    %20 = arith.xori %17, %19 : vector<8x128xi32>
    %c-2073254261_i32 = arith.constant -2073254261 : i32
    %21 = vector.broadcast %c-2073254261_i32 : i32 to vector<8x128xi32>
    %22 = arith.muli %20, %21 : vector<8x128xi32>
    %c16_i32_1 = arith.constant 16 : i32
    %23 = vector.broadcast %c16_i32_1 : i32 to vector<8x128xi32>
    %24 = arith.shrui %22, %23 : vector<8x128xi32>
    %25 = arith.xori %22, %24 : vector<8x128xi32>
    %c1_i32_2 = arith.constant 1 : i32
    %26 = vector.broadcast %c1_i32_2 : i32 to vector<8x128xi32>
    %27 = arith.ori %10, %26 : vector<8x128xi32>
    %28 = vector.broadcast %0 : i32 to vector<8x128xi32>
    %29 = arith.xori %27, %28 : vector<8x128xi32>
    %c16_i32_3 = arith.constant 16 : i32
    %30 = vector.broadcast %c16_i32_3 : i32 to vector<8x128xi32>
    %31 = arith.shrui %29, %30 : vector<8x128xi32>
    %32 = arith.xori %29, %31 : vector<8x128xi32>
    %c2146121005_i32_4 = arith.constant 2146121005 : i32
    %33 = vector.broadcast %c2146121005_i32_4 : i32 to vector<8x128xi32>
    %34 = arith.muli %32, %33 : vector<8x128xi32>
    %c15_i32_5 = arith.constant 15 : i32
    %35 = vector.broadcast %c15_i32_5 : i32 to vector<8x128xi32>
    %36 = arith.shrui %34, %35 : vector<8x128xi32>
    %37 = arith.xori %34, %36 : vector<8x128xi32>
    %c-2073254261_i32_6 = arith.constant -2073254261 : i32
    %38 = vector.broadcast %c-2073254261_i32_6 : i32 to vector<8x128xi32>
    %39 = arith.muli %37, %38 : vector<8x128xi32>
    %c16_i32_7 = arith.constant 16 : i32
    %40 = vector.broadcast %c16_i32_7 : i32 to vector<8x128xi32>
    %41 = arith.shrui %39, %40 : vector<8x128xi32>
    %42 = arith.xori %39, %41 : vector<8x128xi32>
    %c9_i32 = arith.constant 9 : i32
    %43 = vector.broadcast %c9_i32 : i32 to vector<8x128xi32>
    %44 = arith.shrui %25, %43 : vector<8x128xi32>
    %c1065353216_i32 = arith.constant 1065353216 : i32
    %45 = vector.broadcast %c1065353216_i32 : i32 to vector<8x128xi32>
    %46 = arith.ori %44, %45 : vector<8x128xi32>
    %47 = tpu.bitcast %46 : vector<8x128xi32> -> vector<8x128xf32>
    %cst = arith.constant 1.000000e+00 : f32
    %48 = vector.broadcast %cst : f32 to vector<8x128xf32>
    %49 = arith.subf %47, %48 : vector<8x128xf32>
    %cst_8 = arith.constant 1.000000e+00 : f32
    %50 = vector.broadcast %cst_8 : f32 to vector<8x128xf32>
    %51 = arith.subf %50, %49 : vector<8x128xf32>
    %c9_i32_9 = arith.constant 9 : i32
    %52 = vector.broadcast %c9_i32_9 : i32 to vector<8x128xi32>
    %53 = arith.shrui %42, %52 : vector<8x128xi32>
    %c1065353216_i32_10 = arith.constant 1065353216 : i32
    %54 = vector.broadcast %c1065353216_i32_10 : i32 to vector<8x128xi32>
    %55 = arith.ori %53, %54 : vector<8x128xi32>
    %56 = tpu.bitcast %55 : vector<8x128xi32> -> vector<8x128xf32>
    %cst_11 = arith.constant 1.000000e+00 : f32
    %57 = vector.broadcast %cst_11 : f32 to vector<8x128xf32>
    %58 = arith.subf %56, %57 : vector<8x128xf32>
    %59 = math.log %51 : vector<8x128xf32>
    %cst_12 = arith.constant -2.000000e+00 : f32
    %60 = vector.broadcast %cst_12 : f32 to vector<8x128xf32>
    %61 = arith.mulf %60, %59 : vector<8x128xf32>
    %62 = math.sqrt %61 : vector<8x128xf32>
    %cst_13 = arith.constant 6.28318548 : f32
    %63 = vector.broadcast %cst_13 : f32 to vector<8x128xf32>
    %64 = arith.mulf %63, %58 : vector<8x128xf32>
    %65 = math.cos %64 : vector<8x128xf32>
    %66 = arith.mulf %62, %65 : vector<8x128xf32>
    %cst_14 = arith.constant 1.57079637 : f32
    %67 = vector.broadcast %cst_14 : f32 to vector<8x128xf32>
    %68 = arith.subf %64, %67 : vector<8x128xf32>
    %69 = math.cos %68 : vector<8x128xf32>
    %70 = arith.mulf %62, %69 : vector<8x128xf32>
    %c0_15 = arith.constant 0 : index
    %c0_16 = arith.constant 0 : index
    %71 = vector.load %arg2[%c0_15, %c0_16] : memref<16x128xf32, #tpu.memory_space<vmem>>, vector<8x128xf32>
    %72 = arith.addf %71, %66 : vector<8x128xf32>
    %c0_17 = arith.constant 0 : index
    %c0_18 = arith.constant 0 : index
    %73 = vector.load %arg3[%c0_17, %c0_18] : memref<16x128xf32, #tpu.memory_space<vmem>>, vector<8x128xf32>
    tpu.vector_store %arg3[%c0_17, %c0_18], %72 {strides = array<i32>} : memref<16x128xf32, #tpu.memory_space<vmem>>, vector<8x128xf32>,
    %c8 = arith.constant 8 : index
    %c0_19 = arith.constant 0 : index
    %74 = vector.load %arg2[%c8, %c0_19] : memref<16x128xf32, #tpu.memory_space<vmem>>, vector<8x128xf32>
    %75 = arith.addf %74, %70 : vector<8x128xf32>
    %c8_20 = arith.constant 8 : index
    %c0_21 = arith.constant 0 : index
    %76 = vector.load %arg3[%c8_20, %c0_21] : memref<16x128xf32, #tpu.memory_space<vmem>>, vector<8x128xf32>
    tpu.vector_store %arg3[%c8_20, %c0_21], %75 {strides = array<i32>} : memref<16x128xf32, #tpu.memory_space<vmem>>, vector<8x128xf32>,
    return
  }
  func.func @transform_0(%arg0: i32, %arg1: memref<1xi32, #tpu.memory_space<smem>>) -> (i32, i32) {
    %c0_i32 = arith.constant 0 : i32
    %c0_i32_0 = arith.constant 0 : i32
    return %arg0, %c0_i32 : i32, i32
  }
  func.func @transform_1(%arg0: i32, %arg1: memref<1xi32, #tpu.memory_space<smem>>) -> (i32, i32) {
    %c0_i32 = arith.constant 0 : i32
    %c0_i32_0 = arith.constant 0 : i32
    return %arg0, %c0_i32 : i32, i32
  }
}

</mosaic_0001>

<llo_original>
// kernel: _sampling_impl.1
$region0: #{_sampling_impl.1}
  #allocation0 [shape = 'u32[]', space=smem, size = 0x4, offset = 0x4, fixed_abs, tag = 'smem constant byte address 0x4 - core index']
  #allocation1 [shape = 'u32[72,128]{1,0:T(1,128)}', space=vmem, size = 0x9000, scoped, tag = 'internal scratch']
  #allocation2 [shape = 's32[1]{0}', space=sflag, size = 0x4, scoped, tag = 'scoped memory for _sampling_impl.1']
  #allocation3 [shape = 's32[1]{0:T(128)S(6)}', space=smem, size = 0x200, scoped, tag = 'prefetched SMEM operand 0']
  %s0 = inlined_call_operand.<no memory space> [shape: s32[1], index: 0, kind: input, shape index: {}]
  %s1 = inlined_call_operand.vmem [shape: f32[16,128], index: 1, kind: input, shape index: {}]
  %s2 = inlined_call_operand.vmem [shape: f32[16,128], index: 2, kind: output, shape index: {}]
  %s3 = sld [smem:[#allocation0]]
  $region14: #{_sampling_impl.1} parent=0
    _
  %s5 = ssub.s32 1, %s3
  %s6 = scalar_select 0, %s5, %s3
  %7 = sst [smem:[#allocation3]] %s0
  // Predicated region
  $region2: #{_sampling_impl.1} parent=0 // pred_check
    _
  $region3: #{_sampling_impl.1} parent=0 // pred_check_branch
    %9 = sbr.rel (0) target = $region5
  $region4: #{_sampling_impl.1} parent=0 // pred_region
    _
  $region5: #{_sampling_impl.1} parent=0 // pred_fallthru
    _
  %s10 = sld [smem:[#allocation3]]
  %s11 = smul.u32 0, 16
  %v12 = vlaneseq
  %v13 = vshrl.u32 %v12, 7
  %v14 = vstv %s11
  %v15 = vadd.s32 %v13, %v14
  %v16 = vlaneseq
  %v17 = vand.u32 %v16, 127
  %v18 = vmul.u32 %v15, 128
  %v19 = vadd.s32 %v18, %v17
  %v20 = vshll.u32 %v19, 1
  %v21 = vstv %s10
  %v22 = vxor.u32 %v20, %v21
  %v23 = vshrl.u32 %v22, 16
  %v24 = vxor.u32 %v22, %v23
  %v25 = vmul.u32 %v24, 2146121005
  %v26 = vshrl.u32 %v25, 15
  %v27 = vxor.u32 %v25, %v26
  %v28 = vmul.u32 %v27, 2221713035
  %v29 = vshrl.u32 %v28, 16
  %v30 = vxor.u32 %v28, %v29
  %v31 = vor.u32 %v20, 1
  %v32 = vxor.u32 %v31, %v21
  %v33 = vshrl.u32 %v32, 16
  %v34 = vxor.u32 %v32, %v33
  %v35 = vmul.u32 %v34, 2146121005
  %v36 = vshrl.u32 %v35, 15
  %v37 = vxor.u32 %v35, %v36
  %v38 = vmul.u32 %v37, 2221713035
  %v39 = vshrl.u32 %v38, 16
  %v40 = vxor.u32 %v38, %v39
  %v41 = vshrl.u32 %v30, 9
  %v42 = vor.u32 %v41, 1065353216
  %v44 = vsub.f32 %v42, 1.0
  %v45 = vsub.f32 1.0, %v44
  %v46 = vshrl.u32 %v40, 9
  %v47 = vor.u32 %v46, 1065353216
  %v49 = vsub.f32 %v47, 1.0
  %v50 = vlog2.pop %v45
  %v51 = vmul.f32 %v50, 0.6931472
  %v52 = vmul.f32 %v51, -2.0
  %v53 = vrsqrt.pop %v52
  %v54 = vmul.f32 %v53, %v52
  %v55 = vmul.f32 %v54, %v53
  %v56 = vmul.f32 0.5, %v55
  %v57 = vsub.f32 1.5, %v56
  %v58 = vmul.f32 %v53, %v57
  %v59 = vmul.f32 %v52, %v58
  %vm60 = vcmp.eq.f32.partialorder %v52, inf
  %v61 = vsel %vm60, %v52, %v59
  %vm62 = vcmp.eq.f32.partialorder %v52, 0.0
  %v63 = vand.u32 %v52, 2147483648
  %v64 = vsel %vm62, %v63, %v61
  %v65 = vmul.f32 %v49, 6.2831855
  %v66 = vand.u32 2147483647, %v65
  %vm67 = vcmp.le.f32.partialorder %v66, 0.7853982
  %vm68 = vcmp.lt.s32.totalorder %v65, 0
  %v69 = vand.u32 %v65, 2139095040
  %v70 = vshrl.u32 %v69, 23
  %v71 = vsub.s32 %v70, 127
  %v72 = vand.u32 2147483647, %v65
  %v73 = vand.u32 %v72, 8388607
  %v74 = vor.u32 %v73, 8388608
  %v75 = vsub.s32 0, %v74
  %v76 = vadd.s32 %v71, 1
  %vm77 = vcmp.gt.s32.totalorder %v76, 0
  %v78 = vsel %vm77, %v76, 0
  %v79 = vshrl.u32 %v78, 5
  %v80 = vand.u32 %v78, 31
  %v81 = vsub.s32 32, %v80
  %v82 = vshrl.u32 683565275, %v81
  %v83 = vshll.u32 683565275, %v80
  %v84 = vshrl.u32 2475754826, %v81
  %v85 = vor.u32 %v83, %v84
  %v86 = vshll.u32 2475754826, %v80
  %v87 = vshrl.u32 2131351028, %v81
  %v88 = vor.u32 %v86, %v87
  %v89 = vshll.u32 2131351028, %v80
  %v90 = vshrl.u32 2102212464, %v81
  %v91 = vor.u32 %v89, %v90
  %v92 = vshll.u32 2102212464, %v80
  %v93 = vshrl.u32 920167782, %v81
  %v94 = vor.u32 %v92, %v93
  %v95 = vshll.u32 920167782, %v80
  %v96 = vshrl.u32 1326507024, %v81
  %v97 = vor.u32 %v95, %v96
  %vm98 = vcmp.lt.s32.totalorder %v79, 1
  %vm99 = vcmp.lt.s32.totalorder %v79, 2
  %vm100 = vcmp.lt.s32.totalorder %v79, 3
  %vm101 = vcmp.lt.s32.totalorder %v79, 4
  %v102 = vsel %vm98, %v82, %v85
  %v103 = vsel %vm101, %v91, 2102212464
  %v104 = vsel %vm100, %v88, %v103
  %v105 = vsel %vm99, %v102, %v104
  %v106 = vsel %vm98, %v85, %v88
  %v107 = vsel %vm101, %v94, 920167782
  %v108 = vsel %vm100, %v91, %v107
  %v109 = vsel %vm99, %v106, %v108
  %v110 = vsel %vm98, %v88, %v91
  %v111 = vsel %vm101, %v97, 1326507024
  %v112 = vsel %vm100, %v94, %v111
  %v113 = vsel %vm99, %v110, %v112
  %v114 = vshll.u32 %v74, 8
  %v115 = vand.u32 %v114, 65535
  %v116 = vshrl.u32 %v114, 16
  %v117 = vand.u32 %v113, 65535
  %v118 = vshrl.u32 %v113, 16
  %v119 = vmul.u32 %v115, %v117
  %v120 = vmul.u32 %v115, %v118
  %v121 = vmul.u32 %v116, %v117
  %v122 = vmul.u32 %v116, %v118
  %v123 = vshll.u32 %v120, 16
  %v124 = vshrl.u32 %v120, 16
  %v125 = vshll.u32 %v121, 16
  %v126 = vshrl.u32 %v121, 16
  %vm127 = vc.u32 %v119, %v123
  %v128 = vsel %vm127, 1, 0
  %v129 = vadd.s32 %v119, %v123
  %v130 = vadd.s32 %v122, %v128
  %vm131 = vc.u32 %v129, %v125
  %v132 = vsel %vm131, 1, 0
  %v133 = vadd.s32 %v129, %v125
  %v134 = vadd.s32 %v130, %v132
  %v135 = vadd.s32 %v134, %v124
  %v136 = vadd.s32 %v135, %v126
  %v137 = vand.u32 %v114, 65535
  %v138 = vshrl.u32 %v114, 16
  %v139 = vand.u32 %v109, 65535
  %v140 = vshrl.u32 %v109, 16
  %v141 = vmul.u32 %v137, %v139
  %v142 = vmul.u32 %v137, %v140
  %v143 = vmul.u32 %v138, %v139
  %v144 = vmul.u32 %v138, %v140
  %v145 = vshll.u32 %v142, 16
  %v146 = vshrl.u32 %v142, 16
  %v147 = vshll.u32 %v143, 16
  %v148 = vshrl.u32 %v143, 16
  %vm149 = vc.u32 %v141, %v145
  %v150 = vsel %vm149, 1, 0
  %v151 = vadd.s32 %v141, %v145
  %v152 = vadd.s32 %v144, %v150
  %vm153 = vc.u32 %v151, %v147
  %v154 = vsel %vm153, 1, 0
  %v155 = vadd.s32 %v151, %v147
  %v156 = vadd.s32 %v152, %v154
  %v157 = vadd.s32 %v156, %v146
  %v158 = vadd.s32 %v157, %v148
  %v159 = vmul.u32 %v114, %v105
  %v160 = vadd.s32 %v136, %v155
  %vm161 = vc.u32 %v136, %v155
  %v162 = vadd.s32 %v158, 1
  %v163 = vsel %vm161, %v162, %v158
  %v164 = vadd.s32 %v159, %v163
  %v165 = vadd.s32 %v164, 536870912
  %v166 = vshrl.u32 %v165, 30
  %v167 = vshll.u32 %v166, 30
  %v168 = vsub.s32 %v164, %v167
  %vm169 = vcmp.lt.s32.totalorder %v168, 0
  %v170 = vsub.s32 0, %v168
  %v171 = vsel %vm169, %v170, %v168
  %v172 = vclz %v171
  %v173 = vsub.s32 %v172, 2
  %vm174 = vcmp.gt.s32.totalorder 0, %v173
  %v175 = vsel %vm174, 0, %v173
  %v176 = vsub.s32 32, %v175
  %v177 = vshll.u32 %v168, %v175
  %v178 = vshrl.u32 %v160, %v176
  %v179 = vor.u32 %v177, %v178
  %v180 = vsub.s32 4294967266, %v175
  %v181 = vadd.s32 %v180, 127
  %v182 = vshll.u32 %v181, 23
  %v183 = vor.u32 4788187, %v182
  %v184 = vand.u32 2147483647, %v183
  %v186 = vcvt.s32.f32 %v179
  %v187 = vmul.f32 %v186, %v184
  %v188 = vxor.u32 %v187, 2147483648
  %v189 = vsel %vm68, %v188, %v187
  %v190 = vsub.s32 4, %v166
  %v191 = vsel %vm68, %v190, %v166
  %v192 = vsel %vm67, %v65, %v189
  %v193 = vsel %vm67, 0, %v191
  %v194 = vmul.f32 %v192, %v192
  %v195 = vmul.f32 %v194, -0.001358992
  %v196 = vadd.f32 %v195, 0.041655596
  %v197 = vmul.f32 %v194, %v196
  %v198 = vadd.f32 %v197, -0.4999988
  %v199 = vmul.f32 %v194, %v198
  %v200 = vadd.f32 1.0, %v199
  %v201 = vmul.f32 %v192, %v192
  %v202 = vmul.f32 %v201, -0.00019511016
  %v203 = vadd.f32 %v202, 0.008332121
  %v204 = vmul.f32 %v201, %v203
  %v205 = vadd.f32 %v204, -0.16666654
  %v206 = vmul.f32 %v201, %v205
  %v207 = vadd.f32 %v206, 1.0
  %v208 = vmul.f32 %v207, %v192
  %vm209 = vweird.f32 %v65
  %v210 = vand.u32 %v193, 3
  %vm211 = vcmp.lt.s32.totalorder %v210, 2
  %vm212 = vcmp.eq.s32.totalorder %v210, 0
  %v213 = vxor.u32 %v208, 2147483648
  %v214 = vsel %vm212, %v200, %v213
  %vm215 = vcmp.eq.s32.totalorder %v210, 2
  %v216 = vxor.u32 %v200, 2147483648
  %v217 = vsel %vm215, %v216, %v208
  %v218 = vsel %vm211, %v214, %v217
  %v219 = vsel %vm209, nan, %v218
  %v220 = vmul.f32 %v64, %v219
  %v221 = vsub.f32 %v65, 1.5707964
  %v222 = vand.u32 2147483647, %v221
  %vm223 = vcmp.le.f32.partialorder %v222, 0.7853982
  %vm224 = vcmp.lt.s32.totalorder %v221, 0
  %v225 = vand.u32 %v221, 2139095040
  %v226 = vshrl.u32 %v225, 23
  %v227 = vsub.s32 %v226, 127
  %v228 = vand.u32 2147483647, %v221
  %v229 = vand.u32 %v228, 8388607
  %v230 = vor.u32 %v229, 8388608
  %v231 = vsub.s32 0, %v230
  %v232 = vadd.s32 %v227, 1
  %vm233 = vcmp.gt.s32.totalorder %v232, 0
  %v234 = vsel %vm233, %v232, 0
  %v235 = vshrl.u32 %v234, 5
  %v236 = vand.u32 %v234, 31
  %v237 = vsub.s32 32, %v236
  %v238 = vshrl.u32 683565275, %v237
  %v239 = vshll.u32 683565275, %v236
  %v240 = vshrl.u32 2475754826, %v237
  %v241 = vor.u32 %v239, %v240
  %v242 = vshll.u32 2475754826, %v236
  %v243 = vshrl.u32 2131351028, %v237
  %v244 = vor.u32 %v242, %v243
  %v245 = vshll.u32 2131351028, %v236
  %v246 = vshrl.u32 2102212464, %v237
  %v247 = vor.u32 %v245, %v246
  %v248 = vshll.u32 2102212464, %v236
  %v249 = vshrl.u32 920167782, %v237
  %v250 = vor.u32 %v248, %v249
  %v251 = vshll.u32 920167782, %v236
  %v252 = vshrl.u32 1326507024, %v237
  %v253 = vor.u32 %v251, %v252
  %vm254 = vcmp.lt.s32.totalorder %v235, 1
  %vm255 = vcmp.lt.s32.totalorder %v235, 2
  %vm256 = vcmp.lt.s32.totalorder %v235, 3
  %vm257 = vcmp.lt.s32.totalorder %v235, 4
  %v258 = vsel %vm254, %v238, %v241
  %v259 = vsel %vm257, %v247, 2102212464
  %v260 = vsel %vm256, %v244, %v259
  %v261 = vsel %vm255, %v258, %v260
  %v262 = vsel %vm254, %v241, %v244
  %v263 = vsel %vm257, %v250, 920167782
  %v264 = vsel %vm256, %v247, %v263
  %v265 = vsel %vm255, %v262, %v264
  %v266 = vsel %vm254, %v244, %v247
  %v267 = vsel %vm257, %v253, 1326507024
  %v268 = vsel %vm256, %v250, %v267
  %v269 = vsel %vm255, %v266, %v268
  %v270 = vshll.u32 %v230, 8
  %v271 = vand.u32 %v270, 65535
  %v272 = vshrl.u32 %v270, 16
  %v273 = vand.u32 %v269, 65535
  %v274 = vshrl.u32 %v269, 16
  %v275 = vmul.u32 %v271, %v273
  %v276 = vmul.u32 %v271, %v274
  %v277 = vmul.u32 %v272, %v273
  %v278 = vmul.u32 %v272, %v274
  %v279 = vshll.u32 %v276, 16
  %v280 = vshrl.u32 %v276, 16
  %v281 = vshll.u32 %v277, 16
  %v282 = vshrl.u32 %v277, 16
  %vm283 = vc.u32 %v275, %v279
  %v284 = vsel %vm283, 1, 0
  %v285 = vadd.s32 %v275, %v279
  %v286 = vadd.s32 %v278, %v284
  %vm287 = vc.u32 %v285, %v281
  %v288 = vsel %vm287, 1, 0
  %v289 = vadd.s32 %v285, %v281
  %v290 = vadd.s32 %v286, %v288
  %v291 = vadd.s32 %v290, %v280
  %v292 = vadd.s32 %v291, %v282
  %v293 = vand.u32 %v270, 65535
  %v294 = vshrl.u32 %v270, 16
  %v295 = vand.u32 %v265, 65535
  %v296 = vshrl.u32 %v265, 16
  %v297 = vmul.u32 %v293, %v295
  %v298 = vmul.u32 %v293, %v296
  %v299 = vmul.u32 %v294, %v295
  %v300 = vmul.u32 %v294, %v296
  %v301 = vshll.u32 %v298, 16
  %v302 = vshrl.u32 %v298, 16
  %v303 = vshll.u32 %v299, 16
  %v304 = vshrl.u32 %v299, 16
  %vm305 = vc.u32 %v297, %v301
  %v306 = vsel %vm305, 1, 0
  %v307 = vadd.s32 %v297, %v301
  %v308 = vadd.s32 %v300, %v306
  %vm309 = vc.u32 %v307, %v303
  %v310 = vsel %vm309, 1, 0
  %v311 = vadd.s32 %v307, %v303
  %v312 = vadd.s32 %v308, %v310
  %v313 = vadd.s32 %v312, %v302
  %v314 = vadd.s32 %v313, %v304
  %v315 = vmul.u32 %v270, %v261
  %v316 = vadd.s32 %v292, %v311
  %vm317 = vc.u32 %v292, %v311
  %v318 = vadd.s32 %v314, 1
  %v319 = vsel %vm317, %v318, %v314
  %v320 = vadd.s32 %v315, %v319
  %v321 = vadd.s32 %v320, 536870912
  %v322 = vshrl.u32 %v321, 30
  %v323 = vshll.u32 %v322, 30
  %v324 = vsub.s32 %v320, %v323
  %vm325 = vcmp.lt.s32.totalorder %v324, 0
  %v326 = vsub.s32 0, %v324
  %v327 = vsel %vm325, %v326, %v324
  %v328 = vclz %v327
  %v329 = vsub.s32 %v328, 2
  %vm330 = vcmp.gt.s32.totalorder 0, %v329
  %v331 = vsel %vm330, 0, %v329
  %v332 = vsub.s32 32, %v331
  %v333 = vshll.u32 %v324, %v331
  %v334 = vshrl.u32 %v316, %v332
  %v335 = vor.u32 %v333, %v334
  %v336 = vsub.s32 4294967266, %v331
  %v337 = vadd.s32 %v336, 127
  %v338 = vshll.u32 %v337, 23
  %v339 = vor.u32 4788187, %v338
  %v340 = vand.u32 2147483647, %v339
  %v342 = vcvt.s32.f32 %v335
  %v343 = vmul.f32 %v342, %v340
  %v344 = vxor.u32 %v343, 2147483648
  %v345 = vsel %vm224, %v344, %v343
  %v346 = vsub.s32 4, %v322
  %v347 = vsel %vm224, %v346, %v322
  %v348 = vsel %vm223, %v221, %v345
  %v349 = vsel %vm223, 0, %v347
  %v350 = vmul.f32 %v348, %v348
  %v351 = vmul.f32 %v350, -0.001358992
  %v352 = vadd.f32 %v351, 0.041655596
  %v353 = vmul.f32 %v350, %v352
  %v354 = vadd.f32 %v353, -0.4999988
  %v355 = vmul.f32 %v350, %v354
  %v356 = vadd.f32 1.0, %v355
  %v357 = vmul.f32 %v348, %v348
  %v358 = vmul.f32 %v357, -0.00019511016
  %v359 = vadd.f32 %v358, 0.008332121
  %v360 = vmul.f32 %v357, %v359
  %v361 = vadd.f32 %v360, -0.16666654
  %v362 = vmul.f32 %v357, %v361
  %v363 = vadd.f32 %v362, 1.0
  %v364 = vmul.f32 %v363, %v348
  %vm365 = vweird.f32 %v221
  %v366 = vand.u32 %v349, 3
  %vm367 = vcmp.lt.s32.totalorder %v366, 2
  %vm368 = vcmp.eq.s32.totalorder %v366, 0
  %v369 = vxor.u32 %v364, 2147483648
  %v370 = vsel %vm368, %v356, %v369
  %vm371 = vcmp.eq.s32.totalorder %v366, 2
  %v372 = vxor.u32 %v356, 2147483648
  %v373 = vsel %vm371, %v372, %v364
  %v374 = vsel %vm367, %v370, %v373
  %v375 = vsel %vm365, nan, %v374
  %v376 = vmul.f32 %v64, %v375
  %v377 = vld [vmem:[%s1] sm:$0xff]
  %v378 = vadd.f32 %v377, %v220
  %379 = vst [vmem:[%s2] sm:$0xff] %v378
  %v380 = vld [vmem:[%s1 + $0x8] sm:$0xff]
  %v381 = vadd.f32 %v380, %v376
  %382 = vst [vmem:[%s2 + $0x8] sm:$0xff] %v381
  // Predicated region
  $region6: #{_sampling_impl.1} parent=0 // pred_check
    _
  $region7: #{_sampling_impl.1} parent=0 // pred_check_branch
    %384 = sbr.rel (0) target = $region9
  $region8: #{_sampling_impl.1} parent=0 // pred_region
    _
  $region9: #{_sampling_impl.1} parent=0 // pred_fallthru
    _
  // Predicated region
  $region10: #{_sampling_impl.1} parent=0 // pred_check
    _
  $region11: #{_sampling_impl.1} parent=0 // pred_check_branch
    %386 = sbr.rel (0) target = $region13
  $region12: #{_sampling_impl.1} parent=0 // pred_region
    _
  $region13: #{_sampling_impl.1} parent=0 // pred_fallthru
    _

</llo_original>
